<compile_context>
chip_gen: v7x
topology: tpu7x:2x2x1
jax: 0.10.0
libtpu: 0.0.40
codegen_flags: <defaults>
</compile_context>

<pallas_src>
import functools
from typing import Any, NamedTuple, Tuple

import jax
import jax.numpy as jnp
from jax.experimental import pallas as pl
from jax.experimental.pallas import tpu as pltpu


def _round_up(n, m):
    return ((n + m - 1) // m) * m


def _cdiv(a, b):
    return -(-a // b)


# --------------------------------------------------------------------------
# Kernel
# --------------------------------------------------------------------------
def _make_decoder_kernel(n_layers):
    """Fused MLP + softmax kernel for `n_layers` Linear layers.

    Padded action lanes carry a -1e30 bias (baked in at prep time), so no
    explicit mask is needed before the softmax.
    """

    def kernel(*refs):
        # refs = (x_ref, w0, w1, ..., w_{L-1}, bias_stack, out_ref)
        x_ref = refs[0]
        w_refs = refs[1:1 + n_layers]
        b_ref = refs[1 + n_layers]
        out_ref = refs[2 + n_layers]

        h = x_ref[...]                                   # bf16 [bb, latent_pad]
        for i in range(n_layers):
            w = w_refs[i][...]                           # bf16 [din_pad, dout_pad]
            dout_pad = w.shape[1]
            b = b_ref[i:i + 1, :dout_pad]                # f32 [1, dout_pad]
            # bf16 MXU operands, f32 accumulation; bias add / ReLU stay f32.
            acc = jnp.dot(h, w, preferred_element_type=jnp.float32) + b
            if i < n_layers - 1:
                # ReLU + downcast fused into one VPU pass; halves the live
                # inter-layer footprint.
                h = jnp.maximum(acc, 0.0).astype(jnp.bfloat16)
            else:
                h = acc                                  # f32 logits (padded lanes ~ -1e30)

        # softmax over dim=1; padded lanes exp() to 0 thanks to the -1e30 bias.
        m = jnp.max(h, axis=-1, keepdims=True)
        e = jnp.exp(h - m)
        denom = jnp.sum(e, axis=-1, keepdims=True)
        inv = pl.reciprocal(denom, approx=True)          # EUP slot, ~free
        out_ref[...] = (e * inv).astype(out_ref.dtype)

    return kernel


# --------------------------------------------------------------------------
# Generation-aware knobs
# --------------------------------------------------------------------------
@functools.lru_cache(maxsize=1)
def _tpu_generation_info():
    """Returns (vmem_capacity_bytes, max_batch_tile, tensorcores_per_chip)."""
    vmem_cap = 128 * 2**20
    try:
        vmem_cap = int(getattr(pltpu.get_tpu_info(), "vmem_capacity_bytes", vmem_cap))
    except Exception:
        pass
    kind = ""
    try:
        kind = jax.devices()[0].device_kind.lower()
    except Exception:
        pass
    if "v7" in kind:
        return vmem_cap, 512, 2     # 64 MiB/TC, 2 TCs: smaller tiles, >=2 grid steps
    if "v6" in kind:
        return vmem_cap, 1024, 1    # 128 MiB VMEM: big tiles amortize per-step overhead
    if "v5" in kind:
        return vmem_cap, 512, 1     # 1 vst slot, pricier spills: moderate tiles
    # Unknown generation: be conservative; infer 2 cores if VMEM looks v7x-sized.
    return vmem_cap, 512, (2 if vmem_cap <= 64 * 2**20 else 1)


def _pick_block_b(batch, max_tile, num_cores):
    n_tiles = max(1, _cdiv(batch, max_tile))
    # On multi-TC chips make sure the ("parallel",) grid axis has work for
    # every core once the batch is big enough for >=16-row tiles each.
    if num_cores > 1 and batch > 16 * num_cores:
        n_tiles = max(n_tiles, num_cores)
    # Balanced tiles (multiple of 16 for dense bf16 sublane packing) to avoid
    # padding e.g. B=513 all the way up to 1024.
    return _round_up(max(_cdiv(batch, n_tiles), 1), 16)


# --------------------------------------------------------------------------
# One-time parameter preparation (hoisted out of the per-call path)
# --------------------------------------------------------------------------
class DecoderParams(NamedTuple):
    padded_w: Tuple[Any, ...]     # tuple of bf16 [din_pad, dout_pad]
    bias_stack: Any               # f32 [n_layers, max_out_pad], softmax mask baked in
    latent_dim: int
    action_dim: int
    latent_pad: int
    action_pad: int
    max_out_pad: int


def prepare_decoder_params(weights, biases, *, param_dtype=jnp.bfloat16):
    """Pad/cast the MLP parameters once; reuse the result across forward calls."""
    assert len(weights) == len(biases) and len(weights) >= 1
    n_layers = len(weights)
    latent_dim = int(weights[0].shape[0])
    action_dim = int(weights[-1].shape[1])

    padded_w = []
    out_pads = []
    for w in weights:
        w = jnp.asarray(w, jnp.float32)
        din, dout = w.shape
        din_p, dout_p = _round_up(din, 128), _round_up(dout, 128)
        wp = jnp.zeros((din_p, dout_p), jnp.float32).at[:din, :dout].set(w)
        padded_w.append(wp.astype(param_dtype))
        out_pads.append(dout_p)
    action_pad = out_pads[-1]
    bmax = max(out_pads)

    # One stacked bias array -> single DMA instead of n_layers tiny ones.
    bias_stack = jnp.zeros((n_layers, bmax), jnp.float32)
    for i, b in enumerate(biases):
        b = jnp.asarray(b, jnp.float32).reshape(-1)
        bias_stack = bias_stack.at[i, :b.shape[0]].set(b)
    # Bake the softmax mask into the last layer's padded action lanes: padded
    # logits become ~-1e30 so exp() underflows to 0 with no in-kernel masking.
    if action_pad > action_dim:
        bias_stack = bias_stack.at[n_layers - 1, action_dim:action_pad].set(-1e30)

    return DecoderParams(tuple(padded_w), bias_stack, latent_dim, action_dim,
                         _round_up(latent_dim, 128), action_pad, bmax)


# --------------------------------------------------------------------------
# Forward
# --------------------------------------------------------------------------
def _const_param_spec(shape, single_buffer):
    index_map = lambda *_: (0,) * len(shape)
    if single_buffer:
        try:
            # Block index never changes -> no need to double-buffer (halves
            # weight residency in VMEM; matters on v7x's 64 MiB).
            return pl.BlockSpec(shape, index_map, pipeline_mode=pl.Buffered(1))
        except Exception:
            pass
    return pl.BlockSpec(shape, index_map)


def decoder_forward(x, params: DecoderParams, *, block_b=None):
    """Fused MLP + softmax.  x: [B, latent_dim] f32.  Returns [B, action_dim] f32."""
    B, latent_dim = x.shape
    assert latent_dim == params.latent_dim
    n_layers = len(params.padded_w)
    latent_pad, action_pad = params.latent_pad, params.action_pad

    vmem_cap, max_tile, num_cores = _tpu_generation_info()

    if block_b is None:
        block_b = _pick_block_b(B, max_tile, num_cores)
    else:
        block_b = _round_up(max(block_b, 1), 16)
    B_pad = _round_up(B, block_b)

    # Activations padded + cast to bf16 in the wrapper (halves input DMA bytes,
    # removes the in-kernel cast); zero rows/cols are inert through the MLP.
    x_p = jnp.zeros((B_pad, latent_pad), jnp.bfloat16)
    x_p = x_p.at[:B, :latent_dim].set(x.astype(jnp.bfloat16))

    kernel = _make_decoder_kernel(n_layers)

    x_spec = pl.BlockSpec((block_b, latent_pad), lambda i: (i, 0))
    out_spec = pl.BlockSpec((block_b, action_pad), lambda i: (i, 0))

    # Generation-aware VMEM budget: resident params (+buffering), pipelined
    # activation tiles, plus slack -- capped below the physical VMEM of this
    # chip (64 MiB/TC on v7x vs 128 MiB on v5e/v6e).
    weight_bytes = sum(int(w.size) * w.dtype.itemsize for w in params.padded_w)
    bias_bytes = int(params.bias_stack.size) * params.bias_stack.dtype.itemsize
    act_bytes = block_b * (latent_pad * 2 + action_pad * 4 + params.max_out_pad * 4)
    want = 2 * (weight_bytes + bias_bytes) + 3 * act_bytes + (8 << 20)
    ceiling = min(int(vmem_cap * 3 // 4), 100 * 2**20)
    vmem_limit = int(min(ceiling, max(32 * 2**20, want)))
    # TODO(synk): for hidden_dim >= ~4K the "all weights resident" strategy no
    # longer fits VMEM; a K-tiled inner pipeline (emit_pipeline / extra grid
    # axis marked "arbitrary") would be needed.  Not required for these shapes.

    def _run(single_buffer_params):
        w_specs = [_const_param_spec(w.shape, single_buffer_params)
                   for w in params.padded_w]
        b_spec = _const_param_spec(params.bias_stack.shape, single_buffer_params)
        return pl.pallas_call(
            kernel,
            out_shape=jax.ShapeDtypeStruct((B_pad, action_pad), jnp.float32),
            grid_spec=pltpu.PrefetchScalarGridSpec(
                num_scalar_prefetch=0,
                grid=(B_pad // block_b,),
                in_specs=[x_spec] + w_specs + [b_spec],
                out_specs=out_spec,
            ),
            compiler_params=pltpu.CompilerParams(
                dimension_semantics=("parallel",),
                vmem_limit_bytes=vmem_limit),
        )(x_p, *params.padded_w, params.bias_stack)

    try:
        out = _run(True)
    except Exception:
        # Fallback for JAX versions / lowerings that reject Buffered(1).
        out = _run(False)

    return out[:B, :params.action_dim]


# --------------------------------------------------------------------------
# Reference + init helpers
# --------------------------------------------------------------------------
def init_mlp_params(key, latent_dim, hidden_dim, action_dim, hidden_depth):
    """Deterministic parameter init matching utils.mlp layer shapes.

    hidden_depth == 0 -> single Linear(latent, action)
    hidden_depth >= 1 -> Linear(latent, hidden) + (depth-1) hidden Linears
                         + Linear(hidden, action)
    Weights are stored as [in, out] (transposed vs. torch.nn.Linear.weight).
    """
    if hidden_depth == 0:
        dims = [(latent_dim, action_dim)]
    else:
        dims = [(latent_dim, hidden_dim)]
        dims += [(hidden_dim, hidden_dim)] * (hidden_depth - 1)
        dims += [(hidden_dim, action_dim)]

    weights, biases = [], []
    for (din, dout) in dims:
        key, kw, kb = jax.random.split(key, 3)
        bound = 1.0 / jnp.sqrt(din)
        weights.append(
            jax.random.uniform(kw, (din, dout), jnp.float32, -bound, bound))
        biases.append(
            jax.random.uniform(kb, (1, dout), jnp.float32, -bound, bound))
    return weights, biases


def decoder_reference(x, weights, biases):
    """Plain-JAX f32 reference for correctness checking."""
    h = x
    for i, (w, b) in enumerate(zip(weights, biases)):
        h = h @ w + b
        if i < len(weights) - 1:
            h = jnp.maximum(h, 0.0)
    return jax.nn.softmax(h, axis=1)


if __name__ == "__main__":
    latent_dim, hidden_dim, hidden_depth, action_dim = 32, 32, 2, 8
    batch = 16

    key = jax.random.PRNGKey(0)
    key, kx = jax.random.split(key)
    x = jax.random.normal(kx, (batch, latent_dim), jnp.float32)

    weights, biases = init_mlp_params(
        key, latent_dim, hidden_dim, action_dim, hidden_depth)

    # Parameter padding / casting done ONCE (hoisted out of the call path).
    prepared = prepare_decoder_params(weights, biases)
    prepared = jax.tree_util.tree_map(
        lambda a: jax.block_until_ready(a) if isinstance(a, jax.Array) else a,
        prepared)

    prob = decoder_forward(x, prepared)
    prob = jax.block_until_ready(prob)

    ref = decoder_reference(x, weights, biases)
    assert prob.shape == (batch, action_dim)
    # Tolerances loosened for bf16 MXU operands + approx reciprocal.
    assert jnp.allclose(jnp.sum(prob, axis=1), 1.0, atol=5e-3)
    assert jnp.allclose(prob, ref, atol=2e-2, rtol=2e-2)

    # TODO(synk): the reference module prints the prob tensor when batch==1;
    # that host-side print has no in-kernel equivalent and is omitted.
    print("KERNEL_OK")
</pallas_src>

<mosaic_0001>
module attributes {stable_mosaic.version = 11 : i64} {
  func.func @kernel(%arg0: i32, %arg1: memref<16x128xbf16, #tpu.memory_space<vmem>>, %arg2: memref<128x128xbf16, #tpu.memory_space<vmem>>, %arg3: memref<128x128xbf16, #tpu.memory_space<vmem>>, %arg4: memref<128x128xbf16, #tpu.memory_space<vmem>>, %arg5: memref<3x128xf32, #tpu.memory_space<vmem>>, %arg6: memref<16x128xf32, #tpu.memory_space<vmem>>) attributes {dimension_semantics = [#tpu.dimension_semantics<parallel>], iteration_bounds = array<i64: 1>, scalar_prefetch = 0 : i64, scratch_operands = 0 : i64, tpu.core_type = #tpu.core_type<tc>, window_params = [{transform_indices = @transform_0, window_bounds = array<i64: 16, 128>}, {pipeline_mode = #tpu.pipeline_mode<synchronous>, transform_indices = @transform_1, window_bounds = array<i64: 128, 128>}, {pipeline_mode = #tpu.pipeline_mode<synchronous>, transform_indices = @transform_2, window_bounds = array<i64: 128, 128>}, {pipeline_mode = #tpu.pipeline_mode<synchronous>, transform_indices = @transform_3, window_bounds = array<i64: 128, 128>}, {pipeline_mode = #tpu.pipeline_mode<synchronous>, transform_indices = @transform_4, window_bounds = array<i64: 3, 128>}, {transform_indices = @transform_5, window_bounds = array<i64: 16, 128>}]} {
    %c0 = arith.constant 0 : index
    %c0_0 = arith.constant 0 : index
    %0 = vector.load %arg1[%c0, %c0_0] : memref<16x128xbf16, #tpu.memory_space<vmem>>, vector<16x128xbf16>
    %c0_1 = arith.constant 0 : index
    %c0_2 = arith.constant 0 : index
    %1 = vector.load %arg2[%c0_1, %c0_2] : memref<128x128xbf16, #tpu.memory_space<vmem>>, vector<128x128xbf16>
    %c0_3 = arith.constant 0 : index
    %c0_4 = arith.constant 0 : index
    %2 = vector.load %arg5[%c0_3, %c0_4] : memref<3x128xf32, #tpu.memory_space<vmem>>, vector<1x128xf32>
    %cst = arith.constant dense<0.000000e+00> : vector<16x128xf32>
    %3 = tpu.matmul %0, %1, %cst {dimension_numbers = #tpu.dot_dimension_numbers<[1], [0], [0], [1], [0, 0, 1, 1], [], []>} : vector<16x128xbf16>, vector<128x128xbf16>, vector<16x128xf32> -> vector<16x128xf32>
    %4 = vector.broadcast %2 : vector<1x128xf32> to vector<16x128xf32>
    %5 = arith.addf %3, %4 : vector<16x128xf32>
    %cst_5 = arith.constant 0.000000e+00 : f32
    %6 = vector.broadcast %cst_5 : f32 to vector<16x128xf32>
    %7 = arith.maximumf %5, %6 : vector<16x128xf32>
    %8 = arith.truncf %7 : vector<16x128xf32> to vector<16x128xbf16>
    %c0_6 = arith.constant 0 : index
    %c0_7 = arith.constant 0 : index
    %9 = vector.load %arg3[%c0_6, %c0_7] : memref<128x128xbf16, #tpu.memory_space<vmem>>, vector<128x128xbf16>
    %c1 = arith.constant 1 : index
    %c0_8 = arith.constant 0 : index
    %10 = vector.load %arg5[%c1, %c0_8] : memref<3x128xf32, #tpu.memory_space<vmem>>, vector<1x128xf32>
    %cst_9 = arith.constant dense<0.000000e+00> : vector<16x128xf32>
    %11 = tpu.matmul %8, %9, %cst_9 {dimension_numbers = #tpu.dot_dimension_numbers<[1], [0], [0], [1], [0, 0, 1, 1], [], []>} : vector<16x128xbf16>, vector<128x128xbf16>, vector<16x128xf32> -> vector<16x128xf32>
    %12 = vector.broadcast %10 : vector<1x128xf32> to vector<16x128xf32>
    %13 = arith.addf %11, %12 : vector<16x128xf32>
    %cst_10 = arith.constant 0.000000e+00 : f32
    %14 = vector.broadcast %cst_10 : f32 to vector<16x128xf32>
    %15 = arith.maximumf %13, %14 : vector<16x128xf32>
    %16 = arith.truncf %15 : vector<16x128xf32> to vector<16x128xbf16>
    %c0_11 = arith.constant 0 : index
    %c0_12 = arith.constant 0 : index
    %17 = vector.load %arg4[%c0_11, %c0_12] : memref<128x128xbf16, #tpu.memory_space<vmem>>, vector<128x128xbf16>
    %c2 = arith.constant 2 : index
    %c0_13 = arith.constant 0 : index
    %18 = vector.load %arg5[%c2, %c0_13] : memref<3x128xf32, #tpu.memory_space<vmem>>, vector<1x128xf32>
    %cst_14 = arith.constant dense<0.000000e+00> : vector<16x128xf32>
    %19 = tpu.matmul %16, %17, %cst_14 {dimension_numbers = #tpu.dot_dimension_numbers<[1], [0], [0], [1], [0, 0, 1, 1], [], []>} : vector<16x128xbf16>, vector<128x128xbf16>, vector<16x128xf32> -> vector<16x128xf32>
    %20 = vector.broadcast %18 : vector<1x128xf32> to vector<16x128xf32>
    %21 = arith.addf %19, %20 : vector<16x128xf32>
    %cst_15 = arith.constant dense<0xFF800000> : vector<16xf32>
    %22 = vector.multi_reduction <maximumf>, %21, %cst_15 [1] : vector<16x128xf32> to vector<16xf32>
    %23 = vector.shape_cast %22 : vector<16xf32> to vector<16x1xf32>
    %24 = vector.broadcast %23 : vector<16x1xf32> to vector<16x128xf32>
    %25 = arith.subf %21, %24 : vector<16x128xf32>
    %26 = math.exp %25 : vector<16x128xf32>
    %cst_16 = arith.constant dense<0.000000e+00> : vector<16xf32>
    %27 = vector.multi_reduction <add>, %26, %cst_16 [1] : vector<16x128xf32> to vector<16xf32>
    %28 = vector.shape_cast %27 : vector<16xf32> to vector<16x1xf32>
    %29 = tpu.reciprocal %28 {approx = true} : vector<16x1xf32> -> vector<16x1xf32>
    %30 = vector.broadcast %29 : vector<16x1xf32> to vector<16x128xf32>
    %31 = arith.mulf %26, %30 : vector<16x128xf32>
    %c0_17 = arith.constant 0 : index
    %c0_18 = arith.constant 0 : index
    %32 = vector.load %arg6[%c0_17, %c0_18] : memref<16x128xf32, #tpu.memory_space<vmem>>, vector<16x128xf32>
    tpu.vector_store %arg6[%c0_17, %c0_18], %31 {strides = array<i32>} : memref<16x128xf32, #tpu.memory_space<vmem>>, vector<16x128xf32>,
    return
  }
  func.func @transform_0(%arg0: i32) -> (i32, i32) {
    %c0_i32 = arith.constant 0 : i32
    %c0_i32_0 = arith.constant 0 : i32
    return %arg0, %c0_i32 : i32, i32
  }
  func.func @transform_1(%arg0: i32) -> (i32, i32) {
    %c0_i32 = arith.constant 0 : i32
    %c0_i32_0 = arith.constant 0 : i32
    %c0_i32_1 = arith.constant 0 : i32
    return %c0_i32, %c0_i32_0 : i32, i32
  }
  func.func @transform_2(%arg0: i32) -> (i32, i32) {
    %c0_i32 = arith.constant 0 : i32
    %c0_i32_0 = arith.constant 0 : i32
    %c0_i32_1 = arith.constant 0 : i32
    return %c0_i32, %c0_i32_0 : i32, i32
  }
  func.func @transform_3(%arg0: i32) -> (i32, i32) {
    %c0_i32 = arith.constant 0 : i32
    %c0_i32_0 = arith.constant 0 : i32
    %c0_i32_1 = arith.constant 0 : i32
    return %c0_i32, %c0_i32_0 : i32, i32
  }
  func.func @transform_4(%arg0: i32) -> (i32, i32) {
    %c0_i32 = arith.constant 0 : i32
    %c0_i32_0 = arith.constant 0 : i32
    %c0_i32_1 = arith.constant 0 : i32
    return %c0_i32, %c0_i32_0 : i32, i32
  }
  func.func @transform_5(%arg0: i32) -> (i32, i32) {
    %c0_i32 = arith.constant 0 : i32
    %c0_i32_0 = arith.constant 0 : i32
    return %arg0, %c0_i32 : i32, i32
  }
}

module attributes {stable_mosaic.version = 11 : i64} {
  func.func @kernel(%arg0: i32, %arg1: memref<16x128xbf16, #tpu.memory_space<vmem>>, %arg2: memref<128x128xbf16, #tpu.memory_space<vmem>>, %arg3: memref<128x128xbf16, #tpu.memory_space<vmem>>, %arg4: memref<128x128xbf16, #tpu.memory_space<vmem>>, %arg5: memref<3x128xf32, #tpu.memory_space<vmem>>, %arg6: memref<16x128xf32, #tpu.memory_space<vmem>>) attributes {dimension_semantics = [#tpu.dimension_semantics<parallel>], iteration_bounds = array<i64: 1>, scalar_prefetch = 0 : i64, scratch_operands = 0 : i64, tpu.core_type = #tpu.core_type<tc>, window_params = [{transform_indices = @transform_0, window_bounds = array<i64: 16, 128>}, {pipeline_mode = #tpu.pipeline_mode<synchronous>, transform_indices = @transform_1, window_bounds = array<i64: 128, 128>}, {pipeline_mode = #tpu.pipeline_mode<synchronous>, transform_indices = @transform_2, window_bounds = array<i64: 128, 128>}, {pipeline_mode = #tpu.pipeline_mode<synchronous>, transform_indices = @transform_3, window_bounds = array<i64: 128, 128>}, {pipeline_mode = #tpu.pipeline_mode<synchronous>, transform_indices = @transform_4, window_bounds = array<i64: 3, 128>}, {transform_indices = @transform_5, window_bounds = array<i64: 16, 128>}]} {
    %c0 = arith.constant 0 : index
    %c0_0 = arith.constant 0 : index
    %0 = vector.load %arg1[%c0, %c0_0] : memref<16x128xbf16, #tpu.memory_space<vmem>>, vector<16x128xbf16>
    %c0_1 = arith.constant 0 : index
    %c0_2 = arith.constant 0 : index
    %1 = vector.load %arg2[%c0_1, %c0_2] : memref<128x128xbf16, #tpu.memory_space<vmem>>, vector<128x128xbf16>
    %c0_3 = arith.constant 0 : index
    %c0_4 = arith.constant 0 : index
    %2 = vector.load %arg5[%c0_3, %c0_4] : memref<3x128xf32, #tpu.memory_space<vmem>>, vector<1x128xf32>
    %cst = arith.constant dense<0.000000e+00> : vector<16x128xf32>
    %3 = tpu.matmul %0, %1, %cst {dimension_numbers = #tpu.dot_dimension_numbers<[1], [0], [0], [1], [0, 0, 1, 1], [], []>} : vector<16x128xbf16>, vector<128x128xbf16>, vector<16x128xf32> -> vector<16x128xf32>
    %4 = vector.broadcast %2 : vector<1x128xf32> to vector<16x128xf32>
    %5 = arith.addf %3, %4 : vector<16x128xf32>
    %cst_5 = arith.constant 0.000000e+00 : f32
    %6 = vector.broadcast %cst_5 : f32 to vector<16x128xf32>
    %7 = arith.maximumf %5, %6 : vector<16x128xf32>
    %8 = arith.truncf %7 : vector<16x128xf32> to vector<16x128xbf16>
    %c0_6 = arith.constant 0 : index
    %c0_7 = arith.constant 0 : index
    %9 = vector.load %arg3[%c0_6, %c0_7] : memref<128x128xbf16, #tpu.memory_space<vmem>>, vector<128x128xbf16>
    %c1 = arith.constant 1 : index
    %c0_8 = arith.constant 0 : index
    %10 = vector.load %arg5[%c1, %c0_8] : memref<3x128xf32, #tpu.memory_space<vmem>>, vector<1x128xf32>
    %cst_9 = arith.constant dense<0.000000e+00> : vector<16x128xf32>
    %11 = tpu.matmul %8, %9, %cst_9 {dimension_numbers = #tpu.dot_dimension_numbers<[1], [0], [0], [1], [0, 0, 1, 1], [], []>} : vector<16x128xbf16>, vector<128x128xbf16>, vector<16x128xf32> -> vector<16x128xf32>
    %12 = vector.broadcast %10 : vector<1x128xf32> to vector<16x128xf32>
    %13 = arith.addf %11, %12 : vector<16x128xf32>
    %cst_10 = arith.constant 0.000000e+00 : f32
    %14 = vector.broadcast %cst_10 : f32 to vector<16x128xf32>
    %15 = arith.maximumf %13, %14 : vector<16x128xf32>
    %16 = arith.truncf %15 : vector<16x128xf32> to vector<16x128xbf16>
    %c0_11 = arith.constant 0 : index
    %c0_12 = arith.constant 0 : index
    %17 = vector.load %arg4[%c0_11, %c0_12] : memref<128x128xbf16, #tpu.memory_space<vmem>>, vector<128x128xbf16>
    %c2 = arith.constant 2 : index
    %c0_13 = arith.constant 0 : index
    %18 = vector.load %arg5[%c2, %c0_13] : memref<3x128xf32, #tpu.memory_space<vmem>>, vector<1x128xf32>
    %cst_14 = arith.constant dense<0.000000e+00> : vector<16x128xf32>
    %19 = tpu.matmul %16, %17, %cst_14 {dimension_numbers = #tpu.dot_dimension_numbers<[1], [0], [0], [1], [0, 0, 1, 1], [], []>} : vector<16x128xbf16>, vector<128x128xbf16>, vector<16x128xf32> -> vector<16x128xf32>
    %20 = vector.broadcast %18 : vector<1x128xf32> to vector<16x128xf32>
    %21 = arith.addf %19, %20 : vector<16x128xf32>
    %cst_15 = arith.constant dense<0xFF800000> : vector<16xf32>
    %22 = vector.multi_reduction <maximumf>, %21, %cst_15 [1] : vector<16x128xf32> to vector<16xf32>
    %23 = vector.shape_cast %22 : vector<16xf32> to vector<16x1xf32>
    %24 = vector.broadcast %23 : vector<16x1xf32> to vector<16x128xf32>
    %25 = arith.subf %21, %24 : vector<16x128xf32>
    %26 = math.exp %25 : vector<16x128xf32>
    %cst_16 = arith.constant dense<0.000000e+00> : vector<16xf32>
    %27 = vector.multi_reduction <add>, %26, %cst_16 [1] : vector<16x128xf32> to vector<16xf32>
    %28 = vector.shape_cast %27 : vector<16xf32> to vector<16x1xf32>
    %29 = tpu.reciprocal %28 {approx = true} : vector<16x1xf32> -> vector<16x1xf32>
    %30 = vector.broadcast %29 : vector<16x1xf32> to vector<16x128xf32>
    %31 = arith.mulf %26, %30 : vector<16x128xf32>
    %c0_17 = arith.constant 0 : index
    %c0_18 = arith.constant 0 : index
    %32 = vector.load %arg6[%c0_17, %c0_18] : memref<16x128xf32, #tpu.memory_space<vmem>>, vector<16x128xf32>
    tpu.vector_store %arg6[%c0_17, %c0_18], %31 {strides = array<i32>} : memref<16x128xf32, #tpu.memory_space<vmem>>, vector<16x128xf32>,
    return
  }
  func.func @transform_0(%arg0: i32) -> (i32, i32) {
    %c0_i32 = arith.constant 0 : i32
    %c0_i32_0 = arith.constant 0 : i32
    return %arg0, %c0_i32 : i32, i32
  }
  func.func @transform_1(%arg0: i32) -> (i32, i32) {
    %c0_i32 = arith.constant 0 : i32
    %c0_i32_0 = arith.constant 0 : i32
    %c0_i32_1 = arith.constant 0 : i32
    return %c0_i32, %c0_i32_0 : i32, i32
  }
  func.func @transform_2(%arg0: i32) -> (i32, i32) {
    %c0_i32 = arith.constant 0 : i32
    %c0_i32_0 = arith.constant 0 : i32
    %c0_i32_1 = arith.constant 0 : i32
    return %c0_i32, %c0_i32_0 : i32, i32
  }
  func.func @transform_3(%arg0: i32) -> (i32, i32) {
    %c0_i32 = arith.constant 0 : i32
    %c0_i32_0 = arith.constant 0 : i32
    %c0_i32_1 = arith.constant 0 : i32
    return %c0_i32, %c0_i32_0 : i32, i32
  }
  func.func @transform_4(%arg0: i32) -> (i32, i32) {
    %c0_i32 = arith.constant 0 : i32
    %c0_i32_0 = arith.constant 0 : i32
    %c0_i32_1 = arith.constant 0 : i32
    return %c0_i32, %c0_i32_0 : i32, i32
  }
  func.func @transform_5(%arg0: i32) -> (i32, i32) {
    %c0_i32 = arith.constant 0 : i32
    %c0_i32_0 = arith.constant 0 : i32
    return %arg0, %c0_i32 : i32, i32
  }
}

</mosaic_0001>

<llo_original>
// kernel: tpu_custom_call.1
$region0: #{tpu_custom_call.1}
  #allocation0 [shape = 'u32[]', space=smem, size = 0x4, offset = 0x4, fixed_abs, tag = 'smem constant byte address 0x4 - core index']
  #allocation1 [shape = 'u32[144,128]{1,0:T(1,128)}', space=vmem, size = 0x12000, scoped, tag = 'internal scratch']
  %s0 = inlined_call_operand.hbm [shape: bf16[16,128], index: 0, kind: input, shape index: {}]
  %s1 = inlined_call_operand.hbm [shape: bf16[128,128], index: 1, kind: input, shape index: {}]
  %s2 = inlined_call_operand.hbm [shape: bf16[128,128], index: 2, kind: input, shape index: {}]
  %s3 = inlined_call_operand.hbm [shape: bf16[128,128], index: 3, kind: input, shape index: {}]
  %s4 = inlined_call_operand.vmem [shape: f32[3,128], index: 4, kind: input, shape index: {}]
  %s5 = inlined_call_operand.hbm [shape: f32[16,128], index: 5, kind: output, shape index: {}]
  %s6 = sld [smem:[#allocation0]]
  $region46: #{tpu_custom_call.1} parent=0
    _
  %s8 = ssub.s32 1, %s6
  %s9 = scalar_select 0, %s8, %s6
  $region1: #{tpu_custom_call.1} parent=0
    #allocation2 [shape = 'u8[4096]{0}', space=vmem, size = 0x1000, scoped, tag = 'input window, operand 0, single buffered']
    #allocation3 [shape = 's32[1]{0}', space=sflag, size = 0x4, scoped, tag = 'scoped memory for tpu_custom_call.1']
    #allocation4 [shape = 's32[1]{0}', space=sflag, size = 0x4, scoped, tag = 'scoped memory for tpu_custom_call.1']
    #allocation5 [shape = 'u8[32768]{0}', space=vmem, size = 0x8000, scoped, tag = 'input window, operand 1, single buffered']
    #allocation6 [shape = 's32[1]{0}', space=sflag, size = 0x4, scoped, tag = 'scoped memory for tpu_custom_call.1']
    #allocation7 [shape = 'u8[32768]{0}', space=vmem, size = 0x8000, scoped, tag = 'input window, operand 2, single buffered']
    #allocation8 [shape = 'u8[32768]{0}', space=vmem, size = 0x8000, scoped, tag = 'input window, operand 3, single buffered']
    #allocation9 [shape = 's32[1]{0}', space=sflag, size = 0x4, scoped, tag = 'scoped memory for tpu_custom_call.1']
    #allocation10 [shape = 'u8[8192]{0}', space=vmem, size = 0x2000, scoped, tag = 'output window, operand 0, single buffered']
    %10 = vsyncpa [#allocation3], 0
    %11 = vsyncpa [#allocation6], 0
    %12 = vsyncpa [#allocation9], 0
    %13 = vsyncpa [#allocation4], 0
    // Predicated region
    $region2: #{tpu_custom_call.1} parent=1 // pred_check
      _
    $region3: #{tpu_custom_call.1} parent=1 // pred_check_branch
      %15 = sbr.rel (0) target = $region5
    $region4: #{tpu_custom_call.1} parent=1 // pred_region
      %s17 = ssub.s32 128, 128
      %18 = vsyncadd [#allocation3], %s17
      %s19 = sshll.u32 [#allocation2], 4
      %s20 = int_to_ptr.vmem [resolvable:$true] %s19
      %25 = dma.hbm_to_vmem [thread:$0]  %s0, 128, %s20, [#allocation3], 64, 64, 4
    $region5: #{tpu_custom_call.1} parent=1 // pred_fallthru
      _
    // Predicated region
    $region6: #{tpu_custom_call.1} parent=1 // pred_check
      _
    $region7: #{tpu_custom_call.1} parent=1 // pred_check_branch
      %27 = sbr.rel (0) target = $region9
    $region8: #{tpu_custom_call.1} parent=1 // pred_region
      %s29 = ssub.s32 1024, 1024
      %30 = vsyncadd [#allocation6], %s29
      %s31 = sshll.u32 [#allocation5], 4
      %s32 = int_to_ptr.vmem [resolvable:$true] %s31
      %37 = dma.hbm_to_vmem [thread:$0]  %s1, 1024, %s32, [#allocation6], 64, 64, 4
    $region9: #{tpu_custom_call.1} parent=1 // pred_fallthru
      _
    // Predicated region
    $region10: #{tpu_custom_call.1} parent=1 // pred_check
      _
    $region11: #{tpu_custom_call.1} parent=1 // pred_check_branch
      %39 = sbr.rel (0) target = $region13
    $region12: #{tpu_custom_call.1} parent=1 // pred_region
      %s41 = ssub.s32 1024, 1024
      %42 = vsyncadd [#allocation6], %s41
      %s43 = sshll.u32 [#allocation7], 4
      %s44 = int_to_ptr.vmem [resolvable:$true] %s43
      %49 = dma.hbm_to_vmem [thread:$0]  %s2, 1024, %s44, [#allocation6], 64, 64, 4
    $region13: #{tpu_custom_call.1} parent=1 // pred_fallthru
      _
    // Predicated region
    $region14: #{tpu_custom_call.1} parent=1 // pred_check
      _
    $region15: #{tpu_custom_call.1} parent=1 // pred_check_branch
      %51 = sbr.rel (0) target = $region17
    $region16: #{tpu_custom_call.1} parent=1 // pred_region
      %s53 = ssub.s32 1024, 1024
      %54 = vsyncadd [#allocation9], %s53
      %s55 = sshll.u32 [#allocation8], 4
      %s56 = int_to_ptr.vmem [resolvable:$true] %s55
      %61 = dma.hbm_to_vmem [thread:$0]  %s3, 1024, %s56, [#allocation9], 64, 64, 4
    $region17: #{tpu_custom_call.1} parent=1 // pred_fallthru
      _
    // Predicated region
    $region18: #{tpu_custom_call.1} parent=1 // pred_check
      _
    $region19: #{tpu_custom_call.1} parent=1 // pred_check_branch
      %63 = sbr.rel (0) target = $region21
    $region20: #{tpu_custom_call.1} parent=1 // pred_region
      _
    $region21: #{tpu_custom_call.1} parent=1 // pred_fallthru
      _
    // Predicated region
    $region22: #{tpu_custom_call.1} parent=1 // pred_check
      _
    $region23: #{tpu_custom_call.1} parent=1 // pred_check_branch
      %65 = sbr.rel (0) target = $region25
    $region24: #{tpu_custom_call.1} parent=1 // pred_region
      %66 = dma.done [#allocation3], 128
    $region25: #{tpu_custom_call.1} parent=1 // pred_fallthru
      _
    // Predicated region
    $region26: #{tpu_custom_call.1} parent=1 // pred_check
      _
    $region27: #{tpu_custom_call.1} parent=1 // pred_check_branch
      %68 = sbr.rel (0) target = $region29
    $region28: #{tpu_custom_call.1} parent=1 // pred_region
      %69 = dma.done [#allocation6], 1024
    $region29: #{tpu_custom_call.1} parent=1 // pred_fallthru
      _
    // Predicated region
    $region30: #{tpu_custom_call.1} parent=1 // pred_check
      _
    $region31: #{tpu_custom_call.1} parent=1 // pred_check_branch
      %71 = sbr.rel (0) target = $region33
    $region32: #{tpu_custom_call.1} parent=1 // pred_region
      %72 = dma.done [#allocation6], 1024
    $region33: #{tpu_custom_call.1} parent=1 // pred_fallthru
      _
    // Predicated region
    $region34: #{tpu_custom_call.1} parent=1 // pred_check
      _
    $region35: #{tpu_custom_call.1} parent=1 // pred_check_branch
      %74 = sbr.rel (0) target = $region37
    $region36: #{tpu_custom_call.1} parent=1 // pred_region
      %75 = dma.done [#allocation9], 1024
    $region37: #{tpu_custom_call.1} parent=1 // pred_fallthru
      _
    %v77 = vld [vmem:[#allocation2] sm:$0xf]
    %v78 = vld [vmem:[#allocation2 + $0x4] sm:$0xf]
    %v79 = vld [vmem:[#allocation5] sm:$0xf]
    %v80 = vld [vmem:[#allocation5 + $0x4] sm:$0xf]
    %v81 = vld [vmem:[#allocation5 + $0x8] sm:$0xf]
    %v82 = vld [vmem:[#allocation5 + $0xc] sm:$0xf]
    %v83 = vld [vmem:[#allocation5 + $0x10] sm:$0xf]
    %v84 = vld [vmem:[#allocation5 + $0x14] sm:$0xf]
    %v85 = vld [vmem:[#allocation5 + $0x18] sm:$0xf]
    %v86 = vld [vmem:[#allocation5 + $0x1c] sm:$0xf]
    %v87 = vld [vmem:[#allocation5 + $0x20] sm:$0xf]
    %v88 = vld [vmem:[#allocation5 + $0x24] sm:$0xf]
    %v89 = vld [vmem:[#allocation5 + $0x28] sm:$0xf]
    %v90 = vld [vmem:[#allocation5 + $0x2c] sm:$0xf]
    %v91 = vld [vmem:[#allocation5 + $0x30] sm:$0xf]
    %v92 = vld [vmem:[#allocation5 + $0x34] sm:$0xf]
    %v93 = vld [vmem:[#allocation5 + $0x38] sm:$0xf]
    %v94 = vld [vmem:[#allocation5 + $0x3c] sm:$0xf]
    %v95 = vld [vmem:[%s4] sm:$0x1]
    %v96 = vlaneseq
    %v97 = vshrl.u32 %v96, 7
    %v98 = vsub.s32 0, %v97
    %v99 = vrot.slane %v95, %v98
    %v102 = vunpack.c.l.b16 %v77
    %v103 = vunpack.c.l.b16 %v78
    %v104 = vpack.c.b16 %v103, %v102
    %v122 = vunpack.c.l.b16 %v79
    %v123 = vunpack.c.l.b16 %v80
    %v124 = vunpack.c.l.b16 %v81
    %v125 = vunpack.c.l.b16 %v82
    %v126 = vunpack.c.l.b16 %v83
    %v127 = vunpack.c.l.b16 %v84
    %v128 = vunpack.c.l.b16 %v85
    %v129 = vunpack.c.l.b16 %v86
    %v130 = vunpack.c.l.b16 %v87
    %v131 = vunpack.c.l.b16 %v88
    %v132 = vunpack.c.l.b16 %v89
    %v133 = vunpack.c.l.b16 %v90
    %v134 = vunpack.c.l.b16 %v91
    %v135 = vunpack.c.l.b16 %v92
    %v136 = vunpack.c.l.b16 %v93
    %v137 = vunpack.c.l.b16 %v94
    %v138 = vpack.c.b16 %v123, %v122
    %v139 = vpack.c.b16 %v125, %v124
    %v140 = vpack.c.b16 %v127, %v126
    %v141 = vpack.c.b16 %v129, %v128
    %v142 = vpack.c.b16 %v131, %v130
    %v143 = vpack.c.b16 %v133, %v132
    %v144 = vpack.c.b16 %v135, %v134
    %v145 = vpack.c.b16 %v137, %v136
    %154 = vmatprep.subr.bf16.mxu0 0
    %155 = vmatpush1.bf16.msra.mxu0 %v138
    %156 = vmatprep.subr.bf16.mxu0 0
    %157 = vmatpush1.bf16.msra.mxu0 %v139
    %158 = vmatprep.subr.bf16.mxu0 0
    %159 = vmatpush1.bf16.msra.mxu0 %v140
    %160 = vmatprep.subr.bf16.mxu0 0
    %161 = vmatpush1.bf16.msra.mxu0 %v141
    %162 = vmatprep.subr.bf16.mxu0 0
    %163 = vmatpush1.bf16.msra.mxu0 %v142
    %164 = vmatprep.subr.bf16.mxu0 0
    %165 = vmatpush1.bf16.msra.mxu0 %v143
    %166 = vmatprep.subr.bf16.mxu0 0
    %167 = vmatpush1.bf16.msra.mxu0 %v144
    %168 = vmatprep.subr.bf16.mxu0 0
    %169 = vmatpush1.bf16.msra.mxu0 %v145
    %170 = vmatprep.subr.bf16.mxu0 0
    %171 = vmatpush1.bf16.msra.mxu0 0
    %172 = vmatprep.subr.bf16.mxu0 0
    %173 = vmatpush1.bf16.msra.mxu0 0
    %174 = vmatprep.subr.bf16.mxu0 0
    %175 = vmatpush1.bf16.msra.mxu0 0
    %176 = vmatprep.subr.bf16.mxu0 0
    %177 = vmatpush1.bf16.msra.mxu0 0
    %178 = vmatprep.subr.bf16.mxu0 0
    %179 = vmatpush1.bf16.msra.mxu0 0
    %180 = vmatprep.subr.bf16.mxu0 0
    %181 = vmatpush1.bf16.msra.mxu0 0
    %182 = vmatprep.subr.bf16.mxu0 0
    %183 = vmatpush1.bf16.msra.mxu0 0
    %184 = vmatprep.subr.bf16.mxu0 0
    %185 = vmatpush1.bf16.msra.mxu0 0
    %186 = vmatprep.mubr.bf16.mxu0 0
    %187 = vmatmul.mubr.bf16.gmra.mrb[0].mxu0 %v104
    %v188 = vpop.f32.mrb[0].mxu0
    %v189 = vadd.f32 %v99, %v188
    %v190 = vpop.f32.mrb[0].mxu0
    %v191 = vpop.f32.mrb[0].mxu0
    %v192 = vadd.f32 %v99, %v191
    %v193 = vpop.f32.mrb[0].mxu0
    %194 = vdwg.mxu0
    %v195 = vmax.f32 %v189, 0.0
    %v196 = vmax.f32 %v192, 0.0
    %v197 = vpack.c.bf16 %v196, %v195
    %v198 = vld [vmem:[#allocation7] sm:$0xf]
    %v199 = vld [vmem:[#allocation7 + $0x4] sm:$0xf]
    %v200 = vld [vmem:[#allocation7 + $0x8] sm:$0xf]
    %v201 = vld [vmem:[#allocation7 + $0xc] sm:$0xf]
    %v202 = vld [vmem:[#allocation7 + $0x10] sm:$0xf]
    %v203 = vld [vmem:[#allocation7 + $0x14] sm:$0xf]
    %v204 = vld [vmem:[#allocation7 + $0x18] sm:$0xf]
    %v205 = vld [vmem:[#allocation7 + $0x1c] sm:$0xf]
    %v206 = vld [vmem:[#allocation7 + $0x20] sm:$0xf]
    %v207 = vld [vmem:[#allocation7 + $0x24] sm:$0xf]
    %v208 = vld [vmem:[#allocation7 + $0x28] sm:$0xf]
    %v209 = vld [vmem:[#allocation7 + $0x2c] sm:$0xf]
    %v210 = vld [vmem:[#allocation7 + $0x30] sm:$0xf]
    %v211 = vld [vmem:[#allocation7 + $0x34] sm:$0xf]
    %v212 = vld [vmem:[#allocation7 + $0x38] sm:$0xf]
    %v213 = vld [vmem:[#allocation7 + $0x3c] sm:$0xf]
    %v214 = vld [vmem:[%s4 + $0x1] sm:$0x1]
    %v215 = vlaneseq
    %v216 = vshrl.u32 %v215, 7
    %v217 = vsub.s32 0, %v216
    %v218 = vrot.slane %v214, %v217
    %v235 = vunpack.c.l.b16 %v198
    %v236 = vunpack.c.l.b16 %v199
    %v237 = vunpack.c.l.b16 %v200
    %v238 = vunpack.c.l.b16 %v201
    %v239 = vunpack.c.l.b16 %v202
    %v240 = vunpack.c.l.b16 %v203
    %v241 = vunpack.c.l.b16 %v204
    %v242 = vunpack.c.l.b16 %v205
    %v243 = vunpack.c.l.b16 %v206
    %v244 = vunpack.c.l.b16 %v207
    %v245 = vunpack.c.l.b16 %v208
    %v246 = vunpack.c.l.b16 %v209
    %v247 = vunpack.c.l.b16 %v210
    %v248 = vunpack.c.l.b16 %v211
    %v249 = vunpack.c.l.b16 %v212
    %v250 = vunpack.c.l.b16 %v213
    %v251 = vpack.c.b16 %v236, %v235
    %v252 = vpack.c.b16 %v238, %v237
    %v253 = vpack.c.b16 %v240, %v239
    %v254 = vpack.c.b16 %v242, %v241
    %v255 = vpack.c.b16 %v244, %v243
    %v256 = vpack.c.b16 %v246, %v245
    %v257 = vpack.c.b16 %v248, %v247
    %v258 = vpack.c.b16 %v250, %v249
    %267 = vmatprep.subr.bf16.mxu0 0
    %268 = vmatpush1.bf16.msra.mxu0 %v251
    %269 = vmatprep.subr.bf16.mxu0 0
    %270 = vmatpush1.bf16.msra.mxu0 %v252
    %271 = vmatprep.subr.bf16.mxu0 0
    %272 = vmatpush1.bf16.msra.mxu0 %v253
    %273 = vmatprep.subr.bf16.mxu0 0
    %274 = vmatpush1.bf16.msra.mxu0 %v254
    %275 = vmatprep.subr.bf16.mxu0 0
    %276 = vmatpush1.bf16.msra.mxu0 %v255
    %277 = vmatprep.subr.bf16.mxu0 0
    %278 = vmatpush1.bf16.msra.mxu0 %v256
    %279 = vmatprep.subr.bf16.mxu0 0
    %280 = vmatpush1.bf16.msra.mxu0 %v257
    %281 = vmatprep.subr.bf16.mxu0 0
    %282 = vmatpush1.bf16.msra.mxu0 %v258
    %283 = vmatprep.subr.bf16.mxu0 0
    %284 = vmatpush1.bf16.msra.mxu0 0
    %285 = vmatprep.subr.bf16.mxu0 0
    %286 = vmatpush1.bf16.msra.mxu0 0
    %287 = vmatprep.subr.bf16.mxu0 0
    %288 = vmatpush1.bf16.msra.mxu0 0
    %289 = vmatprep.subr.bf16.mxu0 0
    %290 = vmatpush1.bf16.msra.mxu0 0
    %291 = vmatprep.subr.bf16.mxu0 0
    %292 = vmatpush1.bf16.msra.mxu0 0
    %293 = vmatprep.subr.bf16.mxu0 0
    %294 = vmatpush1.bf16.msra.mxu0 0
    %295 = vmatprep.subr.bf16.mxu0 0
    %296 = vmatpush1.bf16.msra.mxu0 0
    %297 = vmatprep.subr.bf16.mxu0 0
    %298 = vmatpush1.bf16.msra.mxu0 0
    %299 = vmatprep.mubr.bf16.mxu0 0
    %300 = vmatmul.mubr.bf16.gmra.mrb[0].mxu0 %v197
    %v301 = vpop.f32.mrb[0].mxu0
    %v302 = vadd.f32 %v218, %v301
    %v303 = vpop.f32.mrb[0].mxu0
    %v304 = vpop.f32.mrb[0].mxu0
    %v305 = vadd.f32 %v218, %v304
    %v306 = vpop.f32.mrb[0].mxu0
    %307 = vdwg.mxu0
    %v308 = vmax.f32 %v302, 0.0
    %v309 = vmax.f32 %v305, 0.0
    %v310 = vpack.c.bf16 %v309, %v308
    %v311 = vld [vmem:[#allocation8] sm:$0xf]
    %v312 = vld [vmem:[#allocation8 + $0x4] sm:$0xf]
    %v313 = vld [vmem:[#allocation8 + $0x8] sm:$0xf]
    %v314 = vld [vmem:[#allocation8 + $0xc] sm:$0xf]
    %v315 = vld [vmem:[#allocation8 + $0x10] sm:$0xf]
    %v316 = vld [vmem:[#allocation8 + $0x14] sm:$0xf]
    %v317 = vld [vmem:[#allocation8 + $0x18] sm:$0xf]
    %v318 = vld [vmem:[#allocation8 + $0x1c] sm:$0xf]
    %v319 = vld [vmem:[#allocation8 + $0x20] sm:$0xf]
    %v320 = vld [vmem:[#allocation8 + $0x24] sm:$0xf]
    %v321 = vld [vmem:[#allocation8 + $0x28] sm:$0xf]
    %v322 = vld [vmem:[#allocation8 + $0x2c] sm:$0xf]
    %v323 = vld [vmem:[#allocation8 + $0x30] sm:$0xf]
    %v324 = vld [vmem:[#allocation8 + $0x34] sm:$0xf]
    %v325 = vld [vmem:[#allocation8 + $0x38] sm:$0xf]
    %v326 = vld [vmem:[#allocation8 + $0x3c] sm:$0xf]
    %v327 = vld [vmem:[%s4 + $0x2] sm:$0x1]
    %v328 = vlaneseq
    %v329 = vshrl.u32 %v328, 7
    %v330 = vsub.s32 0, %v329
    %v331 = vrot.slane %v327, %v330
    %v348 = vunpack.c.l.b16 %v311
    %v349 = vunpack.c.l.b16 %v312
    %v350 = vunpack.c.l.b16 %v313
    %v351 = vunpack.c.l.b16 %v314
    %v352 = vunpack.c.l.b16 %v315
    %v353 = vunpack.c.l.b16 %v316
    %v354 = vunpack.c.l.b16 %v317
    %v355 = vunpack.c.l.b16 %v318
    %v356 = vunpack.c.l.b16 %v319
    %v357 = vunpack.c.l.b16 %v320
    %v358 = vunpack.c.l.b16 %v321
    %v359 = vunpack.c.l.b16 %v322
    %v360 = vunpack.c.l.b16 %v323
    %v361 = vunpack.c.l.b16 %v324
    %v362 = vunpack.c.l.b16 %v325
    %v363 = vunpack.c.l.b16 %v326
    %v364 = vpack.c.b16 %v349, %v348
    %v365 = vpack.c.b16 %v351, %v350
    %v366 = vpack.c.b16 %v353, %v352
    %v367 = vpack.c.b16 %v355, %v354
    %v368 = vpack.c.b16 %v357, %v356
    %v369 = vpack.c.b16 %v359, %v358
    %v370 = vpack.c.b16 %v361, %v360
    %v371 = vpack.c.b16 %v363, %v362
    %380 = vmatprep.subr.bf16.mxu0 0
    %381 = vmatpush1.bf16.msra.mxu0 %v364
    %382 = vmatprep.subr.bf16.mxu0 0
    %383 = vmatpush1.bf16.msra.mxu0 %v365
    %384 = vmatprep.subr.bf16.mxu0 0
    %385 = vmatpush1.bf16.msra.mxu0 %v366
    %386 = vmatprep.subr.bf16.mxu0 0
    %387 = vmatpush1.bf16.msra.mxu0 %v367
    %388 = vmatprep.subr.bf16.mxu0 0
    %389 = vmatpush1.bf16.msra.mxu0 %v368
    %390 = vmatprep.subr.bf16.mxu0 0
    %391 = vmatpush1.bf16.msra.mxu0 %v369
    %392 = vmatprep.subr.bf16.mxu0 0
    %393 = vmatpush1.bf16.msra.mxu0 %v370
    %394 = vmatprep.subr.bf16.mxu0 0
    %395 = vmatpush1.bf16.msra.mxu0 %v371
    %396 = vmatprep.subr.bf16.mxu0 0
    %397 = vmatpush1.bf16.msra.mxu0 0
    %398 = vmatprep.subr.bf16.mxu0 0
    %399 = vmatpush1.bf16.msra.mxu0 0
    %400 = vmatprep.subr.bf16.mxu0 0
    %401 = vmatpush1.bf16.msra.mxu0 0
    %402 = vmatprep.subr.bf16.mxu0 0
    %403 = vmatpush1.bf16.msra.mxu0 0
    %404 = vmatprep.subr.bf16.mxu0 0
    %405 = vmatpush1.bf16.msra.mxu0 0
    %406 = vmatprep.subr.bf16.mxu0 0
    %407 = vmatpush1.bf16.msra.mxu0 0
    %408 = vmatprep.subr.bf16.mxu0 0
    %409 = vmatpush1.bf16.msra.mxu0 0
    %410 = vmatprep.subr.bf16.mxu0 0
    %411 = vmatpush1.bf16.msra.mxu0 0
    %412 = vmatprep.mubr.bf16.mxu0 0
    %413 = vmatmul.mubr.bf16.gmra.mrb[0].mxu0 %v310
    %v414 = vpop.f32.mrb[0].mxu0
    %v415 = vadd.f32 %v331, %v414
    %v416 = vpop.f32.mrb[0].mxu0
    %v417 = vpop.f32.mrb[0].mxu0
    %v418 = vadd.f32 %v331, %v417
    %v419 = vpop.f32.mrb[0].mxu0
    %420 = vdwg.mxu0
    %421 = vmax.xlane.f32.xlu0 %v415
    %v422 = vpop.xlane.xlu0 %421
    %423 = vmax.xlane.f32.xlu0 %v418
    %v424 = vpop.xlane.xlu0 %423
    %v425 = vsub.f32 %v415, %v422
    %v426 = vsub.f32 %v418, %v424
    %v427 = vmul.f32 %v425, 1.442695
    %v428 = vpow.pop %v427
    %v429 = vmul.f32 %v426, 1.442695
    %v430 = vpow.pop %v429
    %431 = vadd.xlane.f32.xlu0 %v428
    %v432 = vpop.xlane.xlu0 %431
    %433 = vadd.xlane.f32.xlu0 %v430
    %v434 = vpop.xlane.xlu0 %433
    %v435 = vrcp.pop %v432
    %v436 = vrcp.pop %v434
    %v437 = vmul.f32 %v428, %v435
    %v438 = vmul.f32 %v430, %v436
    %439 = vst [vmem:[#allocation10] sm:$0xff] %v437
    %440 = vst [vmem:[#allocation10 + $0x8] sm:$0xff] %v438
    // Predicated region
    $region38: #{tpu_custom_call.1} parent=1 // pred_check
      _
    $region39: #{tpu_custom_call.1} parent=1 // pred_check_branch
      %442 = sbr.rel (0) target = $region41
    $region40: #{tpu_custom_call.1} parent=1 // pred_region
      %s444 = ssub.s32 256, 256
      %445 = vsyncadd [#allocation4], %s444
      %s446 = sshll.u32 [#allocation10], 4
      %s447 = int_to_ptr.vmem [resolvable:$true] %s446
      %452 = dma.vmem_to_hbm [thread:$0]  %s447, 256, %s5, [#allocation4], 128, 128, 8
    $region41: #{tpu_custom_call.1} parent=1 // pred_fallthru
      _
    // Predicated region
    $region42: #{tpu_custom_call.1} parent=1 // pred_check
      _
    $region43: #{tpu_custom_call.1} parent=1 // pred_check_branch
      %454 = sbr.rel (0) target = $region45
    $region44: #{tpu_custom_call.1} parent=1 // pred_region
      %455 = dma.done [#allocation4], 256
    $region45: #{tpu_custom_call.1} parent=1 // pred_fallthru
      _
    %456 = vsyncpa [#allocation3], 1
    %457 = vsyncpa [#allocation6], 1
    %458 = vsyncpa [#allocation9], 1
    %459 = vsyncpa [#allocation4], 1

// kernel: tpu_custom_call.1
$region0: #{tpu_custom_call.1}
  #allocation0 [shape = 'u32[]', space=smem, size = 0x4, offset = 0x4, fixed_abs, tag = 'smem constant byte address 0x4 - core index']
  #allocation1 [shape = 'u32[144,128]{1,0:T(1,128)}', space=vmem, size = 0x12000, scoped, tag = 'internal scratch']
  %s0 = inlined_call_operand.hbm [shape: bf16[16,128], index: 0, kind: input, shape index: {}]
  %s1 = inlined_call_operand.hbm [shape: bf16[128,128], index: 1, kind: input, shape index: {}]
  %s2 = inlined_call_operand.hbm [shape: bf16[128,128], index: 2, kind: input, shape index: {}]
  %s3 = inlined_call_operand.hbm [shape: bf16[128,128], index: 3, kind: input, shape index: {}]
  %s4 = inlined_call_operand.vmem [shape: f32[3,128], index: 4, kind: input, shape index: {}]
  %s5 = inlined_call_operand.hbm [shape: f32[16,128], index: 5, kind: output, shape index: {}]
  %s6 = sld [smem:[#allocation0]]
  $region46: #{tpu_custom_call.1} parent=0
    _
  %s8 = ssub.s32 1, %s6
  %s9 = scalar_select 0, %s8, %s6
  $region1: #{tpu_custom_call.1} parent=0
    #allocation2 [shape = 'u8[4096]{0}', space=vmem, size = 0x1000, scoped, tag = 'input window, operand 0, single buffered']
    #allocation3 [shape = 's32[1]{0}', space=sflag, size = 0x4, scoped, tag = 'scoped memory for tpu_custom_call.1']
    #allocation4 [shape = 's32[1]{0}', space=sflag, size = 0x4, scoped, tag = 'scoped memory for tpu_custom_call.1']
    #allocation5 [shape = 'u8[32768]{0}', space=vmem, size = 0x8000, scoped, tag = 'input window, operand 1, single buffered']
    #allocation6 [shape = 's32[1]{0}', space=sflag, size = 0x4, scoped, tag = 'scoped memory for tpu_custom_call.1']
    #allocation7 [shape = 'u8[32768]{0}', space=vmem, size = 0x8000, scoped, tag = 'input window, operand 2, single buffered']
    #allocation8 [shape = 'u8[32768]{0}', space=vmem, size = 0x8000, scoped, tag = 'input window, operand 3, single buffered']
    #allocation9 [shape = 's32[1]{0}', space=sflag, size = 0x4, scoped, tag = 'scoped memory for tpu_custom_call.1']
    #allocation10 [shape = 'u8[8192]{0}', space=vmem, size = 0x2000, scoped, tag = 'output window, operand 0, single buffered']
    %10 = vsyncpa [#allocation3], 0
    %11 = vsyncpa [#allocation6], 0
    %12 = vsyncpa [#allocation9], 0
    %13 = vsyncpa [#allocation4], 0
    // Predicated region
    $region2: #{tpu_custom_call.1} parent=1 // pred_check
      _
    $region3: #{tpu_custom_call.1} parent=1 // pred_check_branch
      %15 = sbr.rel (0) target = $region5
    $region4: #{tpu_custom_call.1} parent=1 // pred_region
      %s17 = ssub.s32 128, 128
      %18 = vsyncadd [#allocation3], %s17
      %s19 = sshll.u32 [#allocation2], 4
      %s20 = int_to_ptr.vmem [resolvable:$true] %s19
      %25 = dma.hbm_to_vmem [thread:$0]  %s0, 128, %s20, [#allocation3], 64, 64, 4
    $region5: #{tpu_custom_call.1} parent=1 // pred_fallthru
      _
    // Predicated region
    $region6: #{tpu_custom_call.1} parent=1 // pred_check
      _
    $region7: #{tpu_custom_call.1} parent=1 // pred_check_branch
      %27 = sbr.rel (0) target = $region9
    $region8: #{tpu_custom_call.1} parent=1 // pred_region
      %s29 = ssub.s32 1024, 1024
      %30 = vsyncadd [#allocation6], %s29
      %s31 = sshll.u32 [#allocation5], 4
      %s32 = int_to_ptr.vmem [resolvable:$true] %s31
      %37 = dma.hbm_to_vmem [thread:$0]  %s1, 1024, %s32, [#allocation6], 64, 64, 4
    $region9: #{tpu_custom_call.1} parent=1 // pred_fallthru
      _
    // Predicated region
    $region10: #{tpu_custom_call.1} parent=1 // pred_check
      _
    $region11: #{tpu_custom_call.1} parent=1 // pred_check_branch
      %39 = sbr.rel (0) target = $region13
    $region12: #{tpu_custom_call.1} parent=1 // pred_region
      %s41 = ssub.s32 1024, 1024
      %42 = vsyncadd [#allocation6], %s41
      %s43 = sshll.u32 [#allocation7], 4
      %s44 = int_to_ptr.vmem [resolvable:$true] %s43
      %49 = dma.hbm_to_vmem [thread:$0]  %s2, 1024, %s44, [#allocation6], 64, 64, 4
    $region13: #{tpu_custom_call.1} parent=1 // pred_fallthru
      _
    // Predicated region
    $region14: #{tpu_custom_call.1} parent=1 // pred_check
      _
    $region15: #{tpu_custom_call.1} parent=1 // pred_check_branch
      %51 = sbr.rel (0) target = $region17
    $region16: #{tpu_custom_call.1} parent=1 // pred_region
      %s53 = ssub.s32 1024, 1024
      %54 = vsyncadd [#allocation9], %s53
      %s55 = sshll.u32 [#allocation8], 4
      %s56 = int_to_ptr.vmem [resolvable:$true] %s55
      %61 = dma.hbm_to_vmem [thread:$0]  %s3, 1024, %s56, [#allocation9], 64, 64, 4
    $region17: #{tpu_custom_call.1} parent=1 // pred_fallthru
      _
    // Predicated region
    $region18: #{tpu_custom_call.1} parent=1 // pred_check
      _
    $region19: #{tpu_custom_call.1} parent=1 // pred_check_branch
      %63 = sbr.rel (0) target = $region21
    $region20: #{tpu_custom_call.1} parent=1 // pred_region
      _
    $region21: #{tpu_custom_call.1} parent=1 // pred_fallthru
      _
    // Predicated region
    $region22: #{tpu_custom_call.1} parent=1 // pred_check
      _
    $region23: #{tpu_custom_call.1} parent=1 // pred_check_branch
      %65 = sbr.rel (0) target = $region25
    $region24: #{tpu_custom_call.1} parent=1 // pred_region
      %66 = dma.done [#allocation3], 128
    $region25: #{tpu_custom_call.1} parent=1 // pred_fallthru
      _
    // Predicated region
    $region26: #{tpu_custom_call.1} parent=1 // pred_check
      _
    $region27: #{tpu_custom_call.1} parent=1 // pred_check_branch
      %68 = sbr.rel (0) target = $region29
    $region28: #{tpu_custom_call.1} parent=1 // pred_region
      %69 = dma.done [#allocation6], 1024
    $region29: #{tpu_custom_call.1} parent=1 // pred_fallthru
      _
    // Predicated region
    $region30: #{tpu_custom_call.1} parent=1 // pred_check
      _
    $region31: #{tpu_custom_call.1} parent=1 // pred_check_branch
      %71 = sbr.rel (0) target = $region33
    $region32: #{tpu_custom_call.1} parent=1 // pred_region
      %72 = dma.done [#allocation6], 1024
    $region33: #{tpu_custom_call.1} parent=1 // pred_fallthru
      _
    // Predicated region
    $region34: #{tpu_custom_call.1} parent=1 // pred_check
      _
    $region35: #{tpu_custom_call.1} parent=1 // pred_check_branch
      %74 = sbr.rel (0) target = $region37
    $region36: #{tpu_custom_call.1} parent=1 // pred_region
      %75 = dma.done [#allocation9], 1024
    $region37: #{tpu_custom_call.1} parent=1 // pred_fallthru
      _
    %v77 = vld [vmem:[#allocation2] sm:$0xf]
    %v78 = vld [vmem:[#allocation2 + $0x4] sm:$0xf]
    %v79 = vld [vmem:[#allocation5] sm:$0xf]
    %v80 = vld [vmem:[#allocation5 + $0x4] sm:$0xf]
    %v81 = vld [vmem:[#allocation5 + $0x8] sm:$0xf]
    %v82 = vld [vmem:[#allocation5 + $0xc] sm:$0xf]
    %v83 = vld [vmem:[#allocation5 + $0x10] sm:$0xf]
    %v84 = vld [vmem:[#allocation5 + $0x14] sm:$0xf]
    %v85 = vld [vmem:[#allocation5 + $0x18] sm:$0xf]
    %v86 = vld [vmem:[#allocation5 + $0x1c] sm:$0xf]
    %v87 = vld [vmem:[#allocation5 + $0x20] sm:$0xf]
    %v88 = vld [vmem:[#allocation5 + $0x24] sm:$0xf]
    %v89 = vld [vmem:[#allocation5 + $0x28] sm:$0xf]
    %v90 = vld [vmem:[#allocation5 + $0x2c] sm:$0xf]
    %v91 = vld [vmem:[#allocation5 + $0x30] sm:$0xf]
    %v92 = vld [vmem:[#allocation5 + $0x34] sm:$0xf]
    %v93 = vld [vmem:[#allocation5 + $0x38] sm:$0xf]
    %v94 = vld [vmem:[#allocation5 + $0x3c] sm:$0xf]
    %v95 = vld [vmem:[%s4] sm:$0x1]
    %v96 = vlaneseq
    %v97 = vshrl.u32 %v96, 7
    %v98 = vsub.s32 0, %v97
    %v99 = vrot.slane %v95, %v98
    %v102 = vunpack.c.l.b16 %v77
    %v103 = vunpack.c.l.b16 %v78
    %v104 = vpack.c.b16 %v103, %v102
    %v122 = vunpack.c.l.b16 %v79
    %v123 = vunpack.c.l.b16 %v80
    %v124 = vunpack.c.l.b16 %v81
    %v125 = vunpack.c.l.b16 %v82
    %v126 = vunpack.c.l.b16 %v83
    %v127 = vunpack.c.l.b16 %v84
    %v128 = vunpack.c.l.b16 %v85
    %v129 = vunpack.c.l.b16 %v86
    %v130 = vunpack.c.l.b16 %v87
    %v131 = vunpack.c.l.b16 %v88
    %v132 = vunpack.c.l.b16 %v89
    %v133 = vunpack.c.l.b16 %v90
    %v134 = vunpack.c.l.b16 %v91
    %v135 = vunpack.c.l.b16 %v92
    %v136 = vunpack.c.l.b16 %v93
    %v137 = vunpack.c.l.b16 %v94
    %v138 = vpack.c.b16 %v123, %v122
    %v139 = vpack.c.b16 %v125, %v124
    %v140 = vpack.c.b16 %v127, %v126
    %v141 = vpack.c.b16 %v129, %v128
    %v142 = vpack.c.b16 %v131, %v130
    %v143 = vpack.c.b16 %v133, %v132
    %v144 = vpack.c.b16 %v135, %v134
    %v145 = vpack.c.b16 %v137, %v136
    %154 = vmatprep.subr.bf16.mxu0 0
    %155 = vmatpush1.bf16.msra.mxu0 %v138
    %156 = vmatprep.subr.bf16.mxu0 0
    %157 = vmatpush1.bf16.msra.mxu0 %v139
    %158 = vmatprep.subr.bf16.mxu0 0
    %159 = vmatpush1.bf16.msra.mxu0 %v140
    %160 = vmatprep.subr.bf16.mxu0 0
    %161 = vmatpush1.bf16.msra.mxu0 %v141
    %162 = vmatprep.subr.bf16.mxu0 0
    %163 = vmatpush1.bf16.msra.mxu0 %v142
    %164 = vmatprep.subr.bf16.mxu0 0
    %165 = vmatpush1.bf16.msra.mxu0 %v143
    %166 = vmatprep.subr.bf16.mxu0 0
    %167 = vmatpush1.bf16.msra.mxu0 %v144
    %168 = vmatprep.subr.bf16.mxu0 0
    %169 = vmatpush1.bf16.msra.mxu0 %v145
    %170 = vmatprep.subr.bf16.mxu0 0
    %171 = vmatpush1.bf16.msra.mxu0 0
    %172 = vmatprep.subr.bf16.mxu0 0
    %173 = vmatpush1.bf16.msra.mxu0 0
    %174 = vmatprep.subr.bf16.mxu0 0
    %175 = vmatpush1.bf16.msra.mxu0 0
    %176 = vmatprep.subr.bf16.mxu0 0
    %177 = vmatpush1.bf16.msra.mxu0 0
    %178 = vmatprep.subr.bf16.mxu0 0
    %179 = vmatpush1.bf16.msra.mxu0 0
    %180 = vmatprep.subr.bf16.mxu0 0
    %181 = vmatpush1.bf16.msra.mxu0 0
    %182 = vmatprep.subr.bf16.mxu0 0
    %183 = vmatpush1.bf16.msra.mxu0 0
    %184 = vmatprep.subr.bf16.mxu0 0
    %185 = vmatpush1.bf16.msra.mxu0 0
    %186 = vmatprep.mubr.bf16.mxu0 0
    %187 = vmatmul.mubr.bf16.gmra.mrb[0].mxu0 %v104
    %v188 = vpop.f32.mrb[0].mxu0
    %v189 = vadd.f32 %v99, %v188
    %v190 = vpop.f32.mrb[0].mxu0
    %v191 = vpop.f32.mrb[0].mxu0
    %v192 = vadd.f32 %v99, %v191
    %v193 = vpop.f32.mrb[0].mxu0
    %194 = vdwg.mxu0
    %v195 = vmax.f32 %v189, 0.0
    %v196 = vmax.f32 %v192, 0.0
    %v197 = vpack.c.bf16 %v196, %v195
    %v198 = vld [vmem:[#allocation7] sm:$0xf]
    %v199 = vld [vmem:[#allocation7 + $0x4] sm:$0xf]
    %v200 = vld [vmem:[#allocation7 + $0x8] sm:$0xf]
    %v201 = vld [vmem:[#allocation7 + $0xc] sm:$0xf]
    %v202 = vld [vmem:[#allocation7 + $0x10] sm:$0xf]
    %v203 = vld [vmem:[#allocation7 + $0x14] sm:$0xf]
    %v204 = vld [vmem:[#allocation7 + $0x18] sm:$0xf]
    %v205 = vld [vmem:[#allocation7 + $0x1c] sm:$0xf]
    %v206 = vld [vmem:[#allocation7 + $0x20] sm:$0xf]
    %v207 = vld [vmem:[#allocation7 + $0x24] sm:$0xf]
    %v208 = vld [vmem:[#allocation7 + $0x28] sm:$0xf]
    %v209 = vld [vmem:[#allocation7 + $0x2c] sm:$0xf]
    %v210 = vld [vmem:[#allocation7 + $0x30] sm:$0xf]
    %v211 = vld [vmem:[#allocation7 + $0x34] sm:$0xf]
    %v212 = vld [vmem:[#allocation7 + $0x38] sm:$0xf]
    %v213 = vld [vmem:[#allocation7 + $0x3c] sm:$0xf]
    %v214 = vld [vmem:[%s4 + $0x1] sm:$0x1]
    %v215 = vlaneseq
    %v216 = vshrl.u32 %v215, 7
    %v217 = vsub.s32 0, %v216
    %v218 = vrot.slane %v214, %v217
    %v235 = vunpack.c.l.b16 %v198
    %v236 = vunpack.c.l.b16 %v199
    %v237 = vunpack.c.l.b16 %v200
    %v238 = vunpack.c.l.b16 %v201
    %v239 = vunpack.c.l.b16 %v202
    %v240 = vunpack.c.l.b16 %v203
    %v241 = vunpack.c.l.b16 %v204
    %v242 = vunpack.c.l.b16 %v205
    %v243 = vunpack.c.l.b16 %v206
    %v244 = vunpack.c.l.b16 %v207
    %v245 = vunpack.c.l.b16 %v208
    %v246 = vunpack.c.l.b16 %v209
    %v247 = vunpack.c.l.b16 %v210
    %v248 = vunpack.c.l.b16 %v211
    %v249 = vunpack.c.l.b16 %v212
    %v250 = vunpack.c.l.b16 %v213
    %v251 = vpack.c.b16 %v236, %v235
    %v252 = vpack.c.b16 %v238, %v237
    %v253 = vpack.c.b16 %v240, %v239
    %v254 = vpack.c.b16 %v242, %v241
    %v255 = vpack.c.b16 %v244, %v243
    %v256 = vpack.c.b16 %v246, %v245
    %v257 = vpack.c.b16 %v248, %v247
    %v258 = vpack.c.b16 %v250, %v249
    %267 = vmatprep.subr.bf16.mxu0 0
    %268 = vmatpush1.bf16.msra.mxu0 %v251
    %269 = vmatprep.subr.bf16.mxu0 0
    %270 = vmatpush1.bf16.msra.mxu0 %v252
    %271 = vmatprep.subr.bf16.mxu0 0
    %272 = vmatpush1.bf16.msra.mxu0 %v253
    %273 = vmatprep.subr.bf16.mxu0 0
    %274 = vmatpush1.bf16.msra.mxu0 %v254
    %275 = vmatprep.subr.bf16.mxu0 0
    %276 = vmatpush1.bf16.msra.mxu0 %v255
    %277 = vmatprep.subr.bf16.mxu0 0
    %278 = vmatpush1.bf16.msra.mxu0 %v256
    %279 = vmatprep.subr.bf16.mxu0 0
    %280 = vmatpush1.bf16.msra.mxu0 %v257
    %281 = vmatprep.subr.bf16.mxu0 0
    %282 = vmatpush1.bf16.msra.mxu0 %v258
    %283 = vmatprep.subr.bf16.mxu0 0
    %284 = vmatpush1.bf16.msra.mxu0 0
    %285 = vmatprep.subr.bf16.mxu0 0
    %286 = vmatpush1.bf16.msra.mxu0 0
    %287 = vmatprep.subr.bf16.mxu0 0
    %288 = vmatpush1.bf16.msra.mxu0 0
    %289 = vmatprep.subr.bf16.mxu0 0
    %290 = vmatpush1.bf16.msra.mxu0 0
    %291 = vmatprep.subr.bf16.mxu0 0
    %292 = vmatpush1.bf16.msra.mxu0 0
    %293 = vmatprep.subr.bf16.mxu0 0
    %294 = vmatpush1.bf16.msra.mxu0 0
    %295 = vmatprep.subr.bf16.mxu0 0
    %296 = vmatpush1.bf16.msra.mxu0 0
    %297 = vmatprep.subr.bf16.mxu0 0
    %298 = vmatpush1.bf16.msra.mxu0 0
    %299 = vmatprep.mubr.bf16.mxu0 0
    %300 = vmatmul.mubr.bf16.gmra.mrb[0].mxu0 %v197
    %v301 = vpop.f32.mrb[0].mxu0
    %v302 = vadd.f32 %v218, %v301
    %v303 = vpop.f32.mrb[0].mxu0
    %v304 = vpop.f32.mrb[0].mxu0
    %v305 = vadd.f32 %v218, %v304
    %v306 = vpop.f32.mrb[0].mxu0
    %307 = vdwg.mxu0
    %v308 = vmax.f32 %v302, 0.0
    %v309 = vmax.f32 %v305, 0.0
    %v310 = vpack.c.bf16 %v309, %v308
    %v311 = vld [vmem:[#allocation8] sm:$0xf]
    %v312 = vld [vmem:[#allocation8 + $0x4] sm:$0xf]
    %v313 = vld [vmem:[#allocation8 + $0x8] sm:$0xf]
    %v314 = vld [vmem:[#allocation8 + $0xc] sm:$0xf]
    %v315 = vld [vmem:[#allocation8 + $0x10] sm:$0xf]
    %v316 = vld [vmem:[#allocation8 + $0x14] sm:$0xf]
    %v317 = vld [vmem:[#allocation8 + $0x18] sm:$0xf]
    %v318 = vld [vmem:[#allocation8 + $0x1c] sm:$0xf]
    %v319 = vld [vmem:[#allocation8 + $0x20] sm:$0xf]
    %v320 = vld [vmem:[#allocation8 + $0x24] sm:$0xf]
    %v321 = vld [vmem:[#allocation8 + $0x28] sm:$0xf]
    %v322 = vld [vmem:[#allocation8 + $0x2c] sm:$0xf]
    %v323 = vld [vmem:[#allocation8 + $0x30] sm:$0xf]
    %v324 = vld [vmem:[#allocation8 + $0x34] sm:$0xf]
    %v325 = vld [vmem:[#allocation8 + $0x38] sm:$0xf]
    %v326 = vld [vmem:[#allocation8 + $0x3c] sm:$0xf]
    %v327 = vld [vmem:[%s4 + $0x2] sm:$0x1]
    %v328 = vlaneseq
    %v329 = vshrl.u32 %v328, 7
    %v330 = vsub.s32 0, %v329
    %v331 = vrot.slane %v327, %v330
    %v348 = vunpack.c.l.b16 %v311
    %v349 = vunpack.c.l.b16 %v312
    %v350 = vunpack.c.l.b16 %v313
    %v351 = vunpack.c.l.b16 %v314
    %v352 = vunpack.c.l.b16 %v315
    %v353 = vunpack.c.l.b16 %v316
    %v354 = vunpack.c.l.b16 %v317
    %v355 = vunpack.c.l.b16 %v318
    %v356 = vunpack.c.l.b16 %v319
    %v357 = vunpack.c.l.b16 %v320
    %v358 = vunpack.c.l.b16 %v321
    %v359 = vunpack.c.l.b16 %v322
    %v360 = vunpack.c.l.b16 %v323
    %v361 = vunpack.c.l.b16 %v324
    %v362 = vunpack.c.l.b16 %v325
    %v363 = vunpack.c.l.b16 %v326
    %v364 = vpack.c.b16 %v349, %v348
    %v365 = vpack.c.b16 %v351, %v350
    %v366 = vpack.c.b16 %v353, %v352
    %v367 = vpack.c.b16 %v355, %v354
    %v368 = vpack.c.b16 %v357, %v356
    %v369 = vpack.c.b16 %v359, %v358
    %v370 = vpack.c.b16 %v361, %v360
    %v371 = vpack.c.b16 %v363, %v362
    %380 = vmatprep.subr.bf16.mxu0 0
    %381 = vmatpush1.bf16.msra.mxu0 %v364
    %382 = vmatprep.subr.bf16.mxu0 0
    %383 = vmatpush1.bf16.msra.mxu0 %v365
    %384 = vmatprep.subr.bf16.mxu0 0
    %385 = vmatpush1.bf16.msra.mxu0 %v366
    %386 = vmatprep.subr.bf16.mxu0 0
    %387 = vmatpush1.bf16.msra.mxu0 %v367
    %388 = vmatprep.subr.bf16.mxu0 0
    %389 = vmatpush1.bf16.msra.mxu0 %v368
    %390 = vmatprep.subr.bf16.mxu0 0
    %391 = vmatpush1.bf16.msra.mxu0 %v369
    %392 = vmatprep.subr.bf16.mxu0 0
    %393 = vmatpush1.bf16.msra.mxu0 %v370
    %394 = vmatprep.subr.bf16.mxu0 0
    %395 = vmatpush1.bf16.msra.mxu0 %v371
    %396 = vmatprep.subr.bf16.mxu0 0
    %397 = vmatpush1.bf16.msra.mxu0 0
    %398 = vmatprep.subr.bf16.mxu0 0
    %399 = vmatpush1.bf16.msra.mxu0 0
    %400 = vmatprep.subr.bf16.mxu0 0
    %401 = vmatpush1.bf16.msra.mxu0 0
    %402 = vmatprep.subr.bf16.mxu0 0
    %403 = vmatpush1.bf16.msra.mxu0 0
    %404 = vmatprep.subr.bf16.mxu0 0
    %405 = vmatpush1.bf16.msra.mxu0 0
    %406 = vmatprep.subr.bf16.mxu0 0
    %407 = vmatpush1.bf16.msra.mxu0 0
    %408 = vmatprep.subr.bf16.mxu0 0
    %409 = vmatpush1.bf16.msra.mxu0 0
    %410 = vmatprep.subr.bf16.mxu0 0
    %411 = vmatpush1.bf16.msra.mxu0 0
    %412 = vmatprep.mubr.bf16.mxu0 0
    %413 = vmatmul.mubr.bf16.gmra.mrb[0].mxu0 %v310
    %v414 = vpop.f32.mrb[0].mxu0
    %v415 = vadd.f32 %v331, %v414
    %v416 = vpop.f32.mrb[0].mxu0
    %v417 = vpop.f32.mrb[0].mxu0
    %v418 = vadd.f32 %v331, %v417
    %v419 = vpop.f32.mrb[0].mxu0
    %420 = vdwg.mxu0
    %421 = vmax.xlane.f32.xlu0 %v415
    %v422 = vpop.xlane.xlu0 %421
    %423 = vmax.xlane.f32.xlu0 %v418
    %v424 = vpop.xlane.xlu0 %423
    %v425 = vsub.f32 %v415, %v422
    %v426 = vsub.f32 %v418, %v424
    %v427 = vmul.f32 %v425, 1.442695
    %v428 = vpow.pop %v427
    %v429 = vmul.f32 %v426, 1.442695
    %v430 = vpow.pop %v429
    %431 = vadd.xlane.f32.xlu0 %v428
    %v432 = vpop.xlane.xlu0 %431
    %433 = vadd.xlane.f32.xlu0 %v430
    %v434 = vpop.xlane.xlu0 %433
    %v435 = vrcp.pop %v432
    %v436 = vrcp.pop %v434
    %v437 = vmul.f32 %v428, %v435
    %v438 = vmul.f32 %v430, %v436
    %439 = vst [vmem:[#allocation10] sm:$0xff] %v437
    %440 = vst [vmem:[#allocation10 + $0x8] sm:$0xff] %v438
    // Predicated region
    $region38: #{tpu_custom_call.1} parent=1 // pred_check
      _
    $region39: #{tpu_custom_call.1} parent=1 // pred_check_branch
      %442 = sbr.rel (0) target = $region41
    $region40: #{tpu_custom_call.1} parent=1 // pred_region
      %s444 = ssub.s32 256, 256
      %445 = vsyncadd [#allocation4], %s444
      %s446 = sshll.u32 [#allocation10], 4
      %s447 = int_to_ptr.vmem [resolvable:$true] %s446
      %452 = dma.vmem_to_hbm [thread:$0]  %s447, 256, %s5, [#allocation4], 128, 128, 8
    $region41: #{tpu_custom_call.1} parent=1 // pred_fallthru
      _
    // Predicated region
    $region42: #{tpu_custom_call.1} parent=1 // pred_check
      _
    $region43: #{tpu_custom_call.1} parent=1 // pred_check_branch
      %454 = sbr.rel (0) target = $region45
    $region44: #{tpu_custom_call.1} parent=1 // pred_region
      %455 = dma.done [#allocation4], 256
    $region45: #{tpu_custom_call.1} parent=1 // pred_fallthru
      _
    %456 = vsyncpa [#allocation3], 1
    %457 = vsyncpa [#allocation6], 1
    %458 = vsyncpa [#allocation9], 1
    %459 = vsyncpa [#allocation4], 1

</llo_original>
